<compile_context>
chip_gen: v7x
topology: tpu7x:2x2x1
jax: 0.10.0
libtpu: 0.0.40
codegen_flags: <defaults>
</compile_context>

<pallas_src>
import functools

import jax
import jax.numpy as jnp
from jax.experimental import pallas as pl
from jax.experimental.pallas import tpu as pltpu

LANE = 128
SUBLANE = 8


def _round_up(x, m):
    return (x + m - 1) // m * m


def _actor_kernel(x_ref, w1_ref, b1_ref, w2_ref, b2_ref, w3_ref, b3_ref,
                  o_ref, h1_ref, h2_ref, *, max_action):
    # Layer 1: (TB, Sp) @ (Sp, H1p) -> relu.  x is already bf16; accumulate
    # in fp32, apply bias+ReLU in fp32, round to bf16 on the scratch store.
    h1 = jnp.dot(x_ref[...], w1_ref[...], preferred_element_type=jnp.float32)
    h1_ref[...] = jnp.maximum(h1 + b1_ref[...], 0.0).astype(jnp.bfloat16)

    # Layer 2: (TB, H1p) @ (H1p, H2p) -> relu   (bf16 scratch feeds MXU directly)
    h2 = jnp.dot(h1_ref[...], w2_ref[...], preferred_element_type=jnp.float32)
    h2_ref[...] = jnp.maximum(h2 + b2_ref[...], 0.0).astype(jnp.bfloat16)

    # Layer 3: (TB, H2p) @ (H2p, Ap) -> max_action * tanh
    h3 = jnp.dot(h2_ref[...], w3_ref[...], preferred_element_type=jnp.float32)
    o_ref[...] = (max_action * jnp.tanh(h3 + b3_ref[...])).astype(o_ref.dtype)


def init_actor_params(key, state_dim, action_dim):
    """PyTorch-style init U(-1/sqrt(fan_in), 1/sqrt(fan_in)); weights stored
    as (in_features, out_features), biases as (1, out_features), fp32."""
    dims = [(state_dim, 400), (400, 300), (300, action_dim)]
    params = []
    for fan_in, fan_out in dims:
        key, kw, kb = jax.random.split(key, 3)
        bound = 1.0 / jnp.sqrt(float(fan_in))
        w = jax.random.uniform(kw, (fan_in, fan_out), jnp.float32,
                               minval=-bound, maxval=bound)
        b = jax.random.uniform(kb, (1, fan_out), jnp.float32,
                               minval=-bound, maxval=bound)
        params.extend([w, b])
    return tuple(params)


def prepare_actor_params(params):
    """One-time prep: zero-pad every feature dim up to a multiple of 128 lanes
    and cast weights to bf16 (biases stay fp32).  Padded rows/cols are zero so
    they never leak into the logical output."""
    w1, b1, w2, b2, w3, b3 = params

    def pad_w(w):
        rp = _round_up(w.shape[0], LANE)
        cp = _round_up(w.shape[1], LANE)
        wp = jnp.pad(w, ((0, rp - w.shape[0]), (0, cp - w.shape[1])))
        return wp.astype(jnp.bfloat16)

    def pad_b(b):
        cp = _round_up(b.shape[1], LANE)
        return jnp.pad(b, ((0, 0), (0, cp - b.shape[1]))).astype(jnp.float32)

    return (pad_w(w1), pad_b(b1), pad_w(w2), pad_b(b2), pad_w(w3), pad_b(b3))


def _pick_batch_tiling(batch, block_batch):
    """Tile size that (a) caps at block_batch, (b) keeps the last tile nearly
    full (minimal padding waste), (c) is a sublane multiple, and (d) yields at
    least 2 tiles when the batch permits (so v7x can use both TensorCores)."""
    n_tiles = max(1, pl.cdiv(batch, block_batch))
    if n_tiles < 2 and batch > SUBLANE:
        n_tiles = 2                      # v7x megacore: shard across 2 TCs
    tb = _round_up(pl.cdiv(batch, n_tiles), SUBLANE)
    bp = _round_up(batch, tb)
    return tb, bp


def actor_forward(x, padded_params, action_dim, max_action, *, block_batch=512):
    """x: (B, state_dim) float32.  Returns (B, action_dim) float32."""
    w1p, b1p, w2p, b2p, w3p, b3p = padded_params
    batch, state_dim = x.shape
    sp = w1p.shape[0]          # padded state dim
    ap = w3p.shape[1]          # padded action dim
    h1p = w1p.shape[1]
    h2p = w2p.shape[1]

    tb, bp = _pick_batch_tiling(batch, block_batch)

    # Pad and cast to bf16 in one shot: halves both the HBM copy and the
    # per-tile activation DMA, and removes the in-kernel cast of the largest
    # input.  Padded rows/cols are zero.
    xp = jnp.pad(x, ((0, bp - batch), (0, sp - state_dim))).astype(jnp.bfloat16)

    grid = (bp // tb,)
    resident = lambda a: pl.BlockSpec(a.shape, lambda i: (0, 0))
    kernel = functools.partial(_actor_kernel, max_action=float(max_action))

    out = pl.pallas_call(
        kernel,
        out_shape=jax.ShapeDtypeStruct((bp, ap), jnp.float32),
        grid=grid,
        in_specs=[
            pl.BlockSpec((tb, sp), lambda i: (i, 0)),   # bf16 activation tile
            resident(w1p), resident(b1p),               # weights/biases stay
            resident(w2p), resident(b2p),               # resident in VMEM
            resident(w3p), resident(b3p),
        ],
        out_specs=pl.BlockSpec((tb, ap), lambda i: (i, 0)),
        scratch_shapes=[
            pltpu.VMEM((tb, h1p), jnp.bfloat16),        # h1 intermediate (bf16)
            pltpu.VMEM((tb, h2p), jnp.bfloat16),        # h2 intermediate (bf16)
        ],
        compiler_params=pltpu.CompilerParams(
            dimension_semantics=("parallel",),          # shard batch tiles
            vmem_limit_bytes=64 * 1024 * 1024,          # headroom for big tb
        ),
    )(xp, w1p, b1p, w2p, b2p, w3p, b3p)

    # Slice padded batch rows and padded action columns back off.
    # TODO(synk): for a fully fused pipeline, downstream consumers could read
    # the padded (bp, 128) slab directly and skip this extra HBM round trip.
    return out[:batch, :action_dim]


if __name__ == "__main__":
    # AntBulletEnv-v0: state_dim=28, action_dim=8, max_action=1.0
    state_dim, action_dim, max_action = 28, 8, 1.0
    batch = 2

    key = jax.random.PRNGKey(0)
    key, kx = jax.random.split(key)
    x = jax.random.normal(kx, (batch, state_dim), dtype=jnp.float32)
    params = init_actor_params(key, state_dim, action_dim)
    padded_params = prepare_actor_params(params)

    out = actor_forward(x, padded_params, action_dim, max_action)
    out = jax.block_until_ready(out)
    assert out.shape == (batch, action_dim)

    w1, b1, w2, b2, w3, b3 = params
    bf = jnp.bfloat16

    # Reference 1: same bf16-weight / fp32-accumulate / bf16-intermediate path
    # in plain JAX (rounds at the same points the kernel does).
    h = jnp.maximum(jnp.dot(x.astype(bf), w1.astype(bf),
                            preferred_element_type=jnp.float32) + b1,
                    0.0).astype(bf)
    h = jnp.maximum(jnp.dot(h, w2.astype(bf),
                            preferred_element_type=jnp.float32) + b2,
                    0.0).astype(bf)
    ref_bf16 = max_action * jnp.tanh(
        jnp.dot(h, w3.astype(bf),
                preferred_element_type=jnp.float32) + b3)

    # Reference 2: full fp32 PyTorch-equivalent math.
    r = jnp.maximum(x @ w1 + b1, 0.0)
    r = jnp.maximum(r @ w2 + b2, 0.0)
    ref_f32 = max_action * jnp.tanh(r @ w3 + b3)

    assert jnp.allclose(out, ref_bf16, atol=2e-3, rtol=2e-3), "bf16-path mismatch"
    assert jnp.allclose(out, ref_f32, atol=5e-2, rtol=5e-2), "fp32-path mismatch"

    print("KERNEL_OK")
</pallas_src>

<mosaic_0001>
module attributes {stable_mosaic.version = 11 : i64} {
  func.func @_actor_kernel(%arg0: i32, %arg1: memref<8x128xbf16, #tpu.memory_space<vmem>>, %arg2: memref<128x512xbf16, #tpu.memory_space<vmem>>, %arg3: memref<1x512xf32, #tpu.memory_space<vmem>>, %arg4: memref<512x384xbf16, #tpu.memory_space<vmem>>, %arg5: memref<1x384xf32, #tpu.memory_space<vmem>>, %arg6: memref<384x128xbf16, #tpu.memory_space<vmem>>, %arg7: memref<1x128xf32, #tpu.memory_space<vmem>>, %arg8: memref<8x128xf32, #tpu.memory_space<vmem>>, %arg9: memref<8x512xbf16, #tpu.memory_space<vmem>>, %arg10: memref<8x384xbf16, #tpu.memory_space<vmem>>) attributes {dimension_semantics = [#tpu.dimension_semantics<parallel>], iteration_bounds = array<i64: 1>, scalar_prefetch = 0 : i64, scratch_operands = 2 : i64, tpu.core_type = #tpu.core_type<tc>, window_params = [{transform_indices = @transform_0, window_bounds = array<i64: 8, 128>}, {pipeline_mode = #tpu.pipeline_mode<synchronous>, transform_indices = @transform_1, window_bounds = array<i64: 128, 512>}, {pipeline_mode = #tpu.pipeline_mode<synchronous>, transform_indices = @transform_2, window_bounds = array<i64: 1, 512>}, {pipeline_mode = #tpu.pipeline_mode<synchronous>, transform_indices = @transform_3, window_bounds = array<i64: 512, 384>}, {pipeline_mode = #tpu.pipeline_mode<synchronous>, transform_indices = @transform_4, window_bounds = array<i64: 1, 384>}, {pipeline_mode = #tpu.pipeline_mode<synchronous>, transform_indices = @transform_5, window_bounds = array<i64: 384, 128>}, {pipeline_mode = #tpu.pipeline_mode<synchronous>, transform_indices = @transform_6, window_bounds = array<i64: 1, 128>}, {transform_indices = @transform_7, window_bounds = array<i64: 8, 128>}]} {
    %c0 = arith.constant 0 : index
    %c0_0 = arith.constant 0 : index
    %0 = vector.load %arg1[%c0, %c0_0] : memref<8x128xbf16, #tpu.memory_space<vmem>>, vector<8x128xbf16>
    %c0_1 = arith.constant 0 : index
    %c0_2 = arith.constant 0 : index
    %1 = vector.load %arg2[%c0_1, %c0_2] : memref<128x512xbf16, #tpu.memory_space<vmem>>, vector<128x512xbf16>
    %cst = arith.constant dense<0.000000e+00> : vector<8x512xf32>
    %2 = tpu.matmul %0, %1, %cst {dimension_numbers = #tpu.dot_dimension_numbers<[1], [0], [0], [1], [0, 0, 1, 1], [], []>} : vector<8x128xbf16>, vector<128x512xbf16>, vector<8x512xf32> -> vector<8x512xf32>
    %c0_3 = arith.constant 0 : index
    %c0_4 = arith.constant 0 : index
    %3 = vector.load %arg3[%c0_3, %c0_4] : memref<1x512xf32, #tpu.memory_space<vmem>>, vector<1x512xf32>
    %4 = vector.broadcast %3 : vector<1x512xf32> to vector<8x512xf32>
    %5 = arith.addf %2, %4 : vector<8x512xf32>
    %cst_5 = arith.constant 0.000000e+00 : f32
    %6 = vector.broadcast %cst_5 : f32 to vector<8x512xf32>
    %7 = arith.maximumf %5, %6 : vector<8x512xf32>
    %8 = arith.truncf %7 : vector<8x512xf32> to vector<8x512xbf16>
    %c0_6 = arith.constant 0 : index
    %c0_7 = arith.constant 0 : index
    %9 = vector.load %arg9[%c0_6, %c0_7] : memref<8x512xbf16, #tpu.memory_space<vmem>>, vector<8x512xbf16>
    tpu.vector_store %arg9[%c0_6, %c0_7], %8 {strides = array<i32>} : memref<8x512xbf16, #tpu.memory_space<vmem>>, vector<8x512xbf16>,
    %c0_8 = arith.constant 0 : index
    %c0_9 = arith.constant 0 : index
    %10 = vector.load %arg9[%c0_8, %c0_9] : memref<8x512xbf16, #tpu.memory_space<vmem>>, vector<8x512xbf16>
    %c0_10 = arith.constant 0 : index
    %c0_11 = arith.constant 0 : index
    %11 = vector.load %arg4[%c0_10, %c0_11] : memref<512x384xbf16, #tpu.memory_space<vmem>>, vector<512x384xbf16>
    %cst_12 = arith.constant dense<0.000000e+00> : vector<8x384xf32>
    %12 = tpu.matmul %10, %11, %cst_12 {dimension_numbers = #tpu.dot_dimension_numbers<[1], [0], [0], [1], [0, 0, 1, 1], [], []>} : vector<8x512xbf16>, vector<512x384xbf16>, vector<8x384xf32> -> vector<8x384xf32>
    %c0_13 = arith.constant 0 : index
    %c0_14 = arith.constant 0 : index
    %13 = vector.load %arg5[%c0_13, %c0_14] : memref<1x384xf32, #tpu.memory_space<vmem>>, vector<1x384xf32>
    %14 = vector.broadcast %13 : vector<1x384xf32> to vector<8x384xf32>
    %15 = arith.addf %12, %14 : vector<8x384xf32>
    %cst_15 = arith.constant 0.000000e+00 : f32
    %16 = vector.broadcast %cst_15 : f32 to vector<8x384xf32>
    %17 = arith.maximumf %15, %16 : vector<8x384xf32>
    %18 = arith.truncf %17 : vector<8x384xf32> to vector<8x384xbf16>
    %c0_16 = arith.constant 0 : index
    %c0_17 = arith.constant 0 : index
    %19 = vector.load %arg10[%c0_16, %c0_17] : memref<8x384xbf16, #tpu.memory_space<vmem>>, vector<8x384xbf16>
    tpu.vector_store %arg10[%c0_16, %c0_17], %18 {strides = array<i32>} : memref<8x384xbf16, #tpu.memory_space<vmem>>, vector<8x384xbf16>,
    %c0_18 = arith.constant 0 : index
    %c0_19 = arith.constant 0 : index
    %20 = vector.load %arg10[%c0_18, %c0_19] : memref<8x384xbf16, #tpu.memory_space<vmem>>, vector<8x384xbf16>
    %c0_20 = arith.constant 0 : index
    %c0_21 = arith.constant 0 : index
    %21 = vector.load %arg6[%c0_20, %c0_21] : memref<384x128xbf16, #tpu.memory_space<vmem>>, vector<384x128xbf16>
    %cst_22 = arith.constant dense<0.000000e+00> : vector<8x128xf32>
    %22 = tpu.matmul %20, %21, %cst_22 {dimension_numbers = #tpu.dot_dimension_numbers<[1], [0], [0], [1], [0, 0, 1, 1], [], []>} : vector<8x384xbf16>, vector<384x128xbf16>, vector<8x128xf32> -> vector<8x128xf32>
    %c0_23 = arith.constant 0 : index
    %c0_24 = arith.constant 0 : index
    %23 = vector.load %arg7[%c0_23, %c0_24] : memref<1x128xf32, #tpu.memory_space<vmem>>, vector<1x128xf32>
    %24 = vector.broadcast %23 : vector<1x128xf32> to vector<8x128xf32>
    %25 = arith.addf %22, %24 : vector<8x128xf32>
    %26 = math.tanh %25 : vector<8x128xf32>
    %cst_25 = arith.constant 1.000000e+00 : f32
    %27 = vector.broadcast %cst_25 : f32 to vector<8x128xf32>
    %28 = arith.mulf %27, %26 : vector<8x128xf32>
    %c0_26 = arith.constant 0 : index
    %c0_27 = arith.constant 0 : index
    %29 = vector.load %arg8[%c0_26, %c0_27] : memref<8x128xf32, #tpu.memory_space<vmem>>, vector<8x128xf32>
    tpu.vector_store %arg8[%c0_26, %c0_27], %28 {strides = array<i32>} : memref<8x128xf32, #tpu.memory_space<vmem>>, vector<8x128xf32>,
    return
  }
  func.func @transform_0(%arg0: i32) -> (i32, i32) {
    %c0_i32 = arith.constant 0 : i32
    %c0_i32_0 = arith.constant 0 : i32
    return %arg0, %c0_i32 : i32, i32
  }
  func.func @transform_1(%arg0: i32) -> (i32, i32) {
    %c0_i32 = arith.constant 0 : i32
    %c0_i32_0 = arith.constant 0 : i32
    %c0_i32_1 = arith.constant 0 : i32
    return %c0_i32, %c0_i32_0 : i32, i32
  }
  func.func @transform_2(%arg0: i32) -> (i32, i32) {
    %c0_i32 = arith.constant 0 : i32
    %c0_i32_0 = arith.constant 0 : i32
    %c0_i32_1 = arith.constant 0 : i32
    return %c0_i32, %c0_i32_0 : i32, i32
  }
  func.func @transform_3(%arg0: i32) -> (i32, i32) {
    %c0_i32 = arith.constant 0 : i32
    %c0_i32_0 = arith.constant 0 : i32
    %c0_i32_1 = arith.constant 0 : i32
    return %c0_i32, %c0_i32_0 : i32, i32
  }
  func.func @transform_4(%arg0: i32) -> (i32, i32) {
    %c0_i32 = arith.constant 0 : i32
    %c0_i32_0 = arith.constant 0 : i32
    %c0_i32_1 = arith.constant 0 : i32
    return %c0_i32, %c0_i32_0 : i32, i32
  }
  func.func @transform_5(%arg0: i32) -> (i32, i32) {
    %c0_i32 = arith.constant 0 : i32
    %c0_i32_0 = arith.constant 0 : i32
    %c0_i32_1 = arith.constant 0 : i32
    return %c0_i32, %c0_i32_0 : i32, i32
  }
  func.func @transform_6(%arg0: i32) -> (i32, i32) {
    %c0_i32 = arith.constant 0 : i32
    %c0_i32_0 = arith.constant 0 : i32
    %c0_i32_1 = arith.constant 0 : i32
    return %c0_i32, %c0_i32_0 : i32, i32
  }
  func.func @transform_7(%arg0: i32) -> (i32, i32) {
    %c0_i32 = arith.constant 0 : i32
    %c0_i32_0 = arith.constant 0 : i32
    return %arg0, %c0_i32 : i32, i32
  }
}

</mosaic_0001>

<llo_original>
// kernel: tpu_custom_call.1
$region0: #{tpu_custom_call.1}
  #allocation0 [shape = 'u32[]', space=smem, size = 0x4, offset = 0x4, fixed_abs, tag = 'smem constant byte address 0x4 - core index']
  #allocation1 [shape = 'u32[144,128]{1,0:T(1,128)}', space=vmem, size = 0x12000, scoped, tag = 'internal scratch']
  #allocation2 [shape = 'bf16[8,512]{1,0:T(8,128)(2,1)}', space=vmem, size = 0x2000, scoped, tag = 'scratch operand']
  #allocation3 [shape = 'bf16[8,384]{1,0:T(8,128)(2,1)}', space=vmem, size = 0x1800, scoped, tag = 'scratch operand']
  %s0 = inlined_call_operand.hbm [shape: bf16[8,128], index: 0, kind: input, shape index: {}]
  %s1 = inlined_call_operand.hbm [shape: bf16[128,512], index: 1, kind: input, shape index: {}]
  %s2 = inlined_call_operand.hbm [shape: f32[1,512], index: 2, kind: input, shape index: {}]
  %s3 = inlined_call_operand.hbm [shape: bf16[512,384], index: 3, kind: input, shape index: {}]
  %s4 = inlined_call_operand.hbm [shape: f32[1,384], index: 4, kind: input, shape index: {}]
  %s5 = inlined_call_operand.hbm [shape: bf16[384,128], index: 5, kind: input, shape index: {}]
  %s6 = inlined_call_operand.hbm [shape: f32[1,128], index: 6, kind: input, shape index: {}]
  %s7 = inlined_call_operand.hbm [shape: f32[8,128], index: 7, kind: output, shape index: {}]
  %s8 = sld [smem:[#allocation0]]
  $region66: #{tpu_custom_call.1} parent=0
    _
  %s10 = ssub.s32 1, %s8
  %s11 = scalar_select 0, %s10, %s8
  $region1: #{tpu_custom_call.1} parent=0
    #allocation4 [shape = 'u8[2048]{0}', space=vmem, size = 0x800, scoped, tag = 'input window, operand 0, single buffered']
    #allocation5 [shape = 's32[1]{0}', space=sflag, size = 0x4, scoped, tag = 'scoped memory for tpu_custom_call.1']
    #allocation6 [shape = 's32[1]{0}', space=sflag, size = 0x4, scoped, tag = 'scoped memory for tpu_custom_call.1']
    #allocation7 [shape = 'u8[131072]{0}', space=vmem, size = 0x20000, scoped, tag = 'input window, operand 1, single buffered']
    #allocation8 [shape = 's32[1]{0}', space=sflag, size = 0x4, scoped, tag = 'scoped memory for tpu_custom_call.1']
    #allocation9 [shape = 'u8[2048]{0}', space=vmem, size = 0x800, scoped, tag = 'input window, operand 2, single buffered']
    #allocation10 [shape = 'u8[393216]{0}', space=vmem, size = 0x60000, scoped, tag = 'input window, operand 3, single buffered']
    #allocation11 [shape = 's32[1]{0}', space=sflag, size = 0x4, scoped, tag = 'scoped memory for tpu_custom_call.1']
    #allocation12 [shape = 'u8[1536]{0}', space=vmem, size = 0x800, scoped, tag = 'input window, operand 4, single buffered']
    #allocation13 [shape = 'u8[98304]{0}', space=vmem, size = 0x18000, scoped, tag = 'input window, operand 5, single buffered']
    #allocation14 [shape = 's32[1]{0}', space=sflag, size = 0x4, scoped, tag = 'scoped memory for tpu_custom_call.1']
    #allocation15 [shape = 'u8[512]{0}', space=vmem, size = 0x400, scoped, tag = 'input window, operand 6, single buffered']
    #allocation16 [shape = 'u8[4096]{0}', space=vmem, size = 0x1000, scoped, tag = 'output window, operand 0, single buffered']
    %12 = vsyncpa [#allocation5], 0
    %13 = vsyncpa [#allocation8], 0
    %14 = vsyncpa [#allocation11], 0
    %15 = vsyncpa [#allocation14], 0
    %16 = vsyncpa [#allocation6], 0
    // Predicated region
    $region2: #{tpu_custom_call.1} parent=1 // pred_check
      _
    $region3: #{tpu_custom_call.1} parent=1 // pred_check_branch
      %18 = sbr.rel (0) target = $region5
    $region4: #{tpu_custom_call.1} parent=1 // pred_region
      %s20 = ssub.s32 64, 64
      %21 = vsyncadd [#allocation5], %s20
      %s23 = sshll.u32 [#allocation4], 4
      %s24 = int_to_ptr.vmem [resolvable:$true] %s23
      %26 = dma.hbm_to_vmem [thread:$0]  %s0, 64, %s24, [#allocation5]
    $region5: #{tpu_custom_call.1} parent=1 // pred_fallthru
      _
    // Predicated region
    $region6: #{tpu_custom_call.1} parent=1 // pred_check
      _
    $region7: #{tpu_custom_call.1} parent=1 // pred_check_branch
      %28 = sbr.rel (0) target = $region9
    $region8: #{tpu_custom_call.1} parent=1 // pred_region
      %s30 = ssub.s32 4096, 4096
      %31 = vsyncadd [#allocation8], %s30
      %s32 = sshll.u32 [#allocation7], 4
      %s33 = int_to_ptr.vmem [resolvable:$true] %s32
      %38 = dma.hbm_to_vmem [thread:$0]  %s1, 4096, %s33, [#allocation8], 256, 256, 16
    $region9: #{tpu_custom_call.1} parent=1 // pred_fallthru
      _
    // Predicated region
    $region10: #{tpu_custom_call.1} parent=1 // pred_check
      _
    $region11: #{tpu_custom_call.1} parent=1 // pred_check_branch
      %40 = sbr.rel (0) target = $region13
    $region12: #{tpu_custom_call.1} parent=1 // pred_region
      %s42 = ssub.s32 64, 64
      %43 = vsyncadd [#allocation8], %s42
      %s45 = sshll.u32 [#allocation9], 4
      %s46 = int_to_ptr.vmem [resolvable:$true] %s45
      %48 = dma.hbm_to_vmem [thread:$0]  %s2, 64, %s46, [#allocation8]
    $region13: #{tpu_custom_call.1} parent=1 // pred_fallthru
      _
    // Predicated region
    $region14: #{tpu_custom_call.1} parent=1 // pred_check
      _
    $region15: #{tpu_custom_call.1} parent=1 // pred_check_branch
      %50 = sbr.rel (0) target = $region17
    $region16: #{tpu_custom_call.1} parent=1 // pred_region
      %s52 = ssub.s32 12288, 12288
      %53 = vsyncadd [#allocation11], %s52
      %s54 = sshll.u32 [#allocation10], 4
      %s55 = int_to_ptr.vmem [resolvable:$true] %s54
      %60 = dma.hbm_to_vmem [thread:$0]  %s3, 12288, %s55, [#allocation11], 192, 192, 12
    $region17: #{tpu_custom_call.1} parent=1 // pred_fallthru
      _
    // Predicated region
    $region18: #{tpu_custom_call.1} parent=1 // pred_check
      _
    $region19: #{tpu_custom_call.1} parent=1 // pred_check_branch
      %62 = sbr.rel (0) target = $region21
    $region20: #{tpu_custom_call.1} parent=1 // pred_region
      %s64 = ssub.s32 48, 48
      %65 = vsyncadd [#allocation11], %s64
      %s67 = sshll.u32 [#allocation12], 4
      %s68 = int_to_ptr.vmem [resolvable:$true] %s67
      %70 = dma.hbm_to_vmem [thread:$0]  %s4, 48, %s68, [#allocation11]
    $region21: #{tpu_custom_call.1} parent=1 // pred_fallthru
      _
    // Predicated region
    $region22: #{tpu_custom_call.1} parent=1 // pred_check
      _
    $region23: #{tpu_custom_call.1} parent=1 // pred_check_branch
      %72 = sbr.rel (0) target = $region25
    $region24: #{tpu_custom_call.1} parent=1 // pred_region
      %s74 = ssub.s32 3072, 3072
      %75 = vsyncadd [#allocation14], %s74
      %s76 = sshll.u32 [#allocation13], 4
      %s77 = int_to_ptr.vmem [resolvable:$true] %s76
      %82 = dma.hbm_to_vmem [thread:$0]  %s5, 3072, %s77, [#allocation14], 64, 64, 4
    $region25: #{tpu_custom_call.1} parent=1 // pred_fallthru
      _
    // Predicated region
    $region26: #{tpu_custom_call.1} parent=1 // pred_check
      _
    $region27: #{tpu_custom_call.1} parent=1 // pred_check_branch
      %84 = sbr.rel (0) target = $region29
    $region28: #{tpu_custom_call.1} parent=1 // pred_region
      %s86 = ssub.s32 16, 16
      %87 = vsyncadd [#allocation14], %s86
      %s89 = sshll.u32 [#allocation15], 4
      %s90 = int_to_ptr.vmem [resolvable:$true] %s89
      %92 = dma.hbm_to_vmem [thread:$0]  %s6, 16, %s90, [#allocation14]
    $region29: #{tpu_custom_call.1} parent=1 // pred_fallthru
      _
    // Predicated region
    $region30: #{tpu_custom_call.1} parent=1 // pred_check
      _
    $region31: #{tpu_custom_call.1} parent=1 // pred_check_branch
      %94 = sbr.rel (0) target = $region33
    $region32: #{tpu_custom_call.1} parent=1 // pred_region
      %95 = dma.done [#allocation5], 64
    $region33: #{tpu_custom_call.1} parent=1 // pred_fallthru
      _
    // Predicated region
    $region34: #{tpu_custom_call.1} parent=1 // pred_check
      _
    $region35: #{tpu_custom_call.1} parent=1 // pred_check_branch
      %97 = sbr.rel (0) target = $region37
    $region36: #{tpu_custom_call.1} parent=1 // pred_region
      %98 = dma.done [#allocation8], 4096
    $region37: #{tpu_custom_call.1} parent=1 // pred_fallthru
      _
    // Predicated region
    $region38: #{tpu_custom_call.1} parent=1 // pred_check
      _
    $region39: #{tpu_custom_call.1} parent=1 // pred_check_branch
      %100 = sbr.rel (0) target = $region41
    $region40: #{tpu_custom_call.1} parent=1 // pred_region
      %101 = dma.done [#allocation8], 64
    $region41: #{tpu_custom_call.1} parent=1 // pred_fallthru
      _
    // Predicated region
    $region42: #{tpu_custom_call.1} parent=1 // pred_check
      _
    $region43: #{tpu_custom_call.1} parent=1 // pred_check_branch
      %103 = sbr.rel (0) target = $region45
    $region44: #{tpu_custom_call.1} parent=1 // pred_region
      %104 = dma.done [#allocation11], 12288
    $region45: #{tpu_custom_call.1} parent=1 // pred_fallthru
      _
    // Predicated region
    $region46: #{tpu_custom_call.1} parent=1 // pred_check
      _
    $region47: #{tpu_custom_call.1} parent=1 // pred_check_branch
      %106 = sbr.rel (0) target = $region49
    $region48: #{tpu_custom_call.1} parent=1 // pred_region
      %107 = dma.done [#allocation11], 48
    $region49: #{tpu_custom_call.1} parent=1 // pred_fallthru
      _
    // Predicated region
    $region50: #{tpu_custom_call.1} parent=1 // pred_check
      _
    $region51: #{tpu_custom_call.1} parent=1 // pred_check_branch
      %109 = sbr.rel (0) target = $region53
    $region52: #{tpu_custom_call.1} parent=1 // pred_region
      %110 = dma.done [#allocation14], 3072
    $region53: #{tpu_custom_call.1} parent=1 // pred_fallthru
      _
    // Predicated region
    $region54: #{tpu_custom_call.1} parent=1 // pred_check
      _
    $region55: #{tpu_custom_call.1} parent=1 // pred_check_branch
      %112 = sbr.rel (0) target = $region57
    $region56: #{tpu_custom_call.1} parent=1 // pred_region
      %113 = dma.done [#allocation14], 16
    $region57: #{tpu_custom_call.1} parent=1 // pred_fallthru
      _
    %v115 = vld [vmem:[#allocation4] sm:$0xf]
    %v116 = vld [vmem:[#allocation7] sm:$0xff]
    %v117 = vld [vmem:[#allocation7 + $0x8] sm:$0xff]
    %v118 = vld [vmem:[#allocation7 + $0x10] sm:$0xff]
    %v119 = vld [vmem:[#allocation7 + $0x18] sm:$0xff]
    %v120 = vld [vmem:[#allocation7 + $0x20] sm:$0xff]
    %v121 = vld [vmem:[#allocation7 + $0x28] sm:$0xff]
    %v122 = vld [vmem:[#allocation7 + $0x30] sm:$0xff]
    %v123 = vld [vmem:[#allocation7 + $0x38] sm:$0xff]
    %v124 = vld [vmem:[#allocation7 + $0x40] sm:$0xff]
    %v125 = vld [vmem:[#allocation7 + $0x48] sm:$0xff]
    %v126 = vld [vmem:[#allocation7 + $0x50] sm:$0xff]
    %v127 = vld [vmem:[#allocation7 + $0x58] sm:$0xff]
    %v128 = vld [vmem:[#allocation7 + $0x60] sm:$0xff]
    %v129 = vld [vmem:[#allocation7 + $0x68] sm:$0xff]
    %v130 = vld [vmem:[#allocation7 + $0x70] sm:$0xff]
    %v131 = vld [vmem:[#allocation7 + $0x78] sm:$0xff]
    %v132 = vld [vmem:[#allocation7 + $0x80] sm:$0xff]
    %v133 = vld [vmem:[#allocation7 + $0x88] sm:$0xff]
    %v134 = vld [vmem:[#allocation7 + $0x90] sm:$0xff]
    %v135 = vld [vmem:[#allocation7 + $0x98] sm:$0xff]
    %v136 = vld [vmem:[#allocation7 + $0xa0] sm:$0xff]
    %v137 = vld [vmem:[#allocation7 + $0xa8] sm:$0xff]
    %v138 = vld [vmem:[#allocation7 + $0xb0] sm:$0xff]
    %v139 = vld [vmem:[#allocation7 + $0xb8] sm:$0xff]
    %v140 = vld [vmem:[#allocation7 + $0xc0] sm:$0xff]
    %v141 = vld [vmem:[#allocation7 + $0xc8] sm:$0xff]
    %v142 = vld [vmem:[#allocation7 + $0xd0] sm:$0xff]
    %v143 = vld [vmem:[#allocation7 + $0xd8] sm:$0xff]
    %v144 = vld [vmem:[#allocation7 + $0xe0] sm:$0xff]
    %v145 = vld [vmem:[#allocation7 + $0xe8] sm:$0xff]
    %v146 = vld [vmem:[#allocation7 + $0xf0] sm:$0xff]
    %v147 = vld [vmem:[#allocation7 + $0xf8] sm:$0xff]
    %v148 = vld [vmem:[#allocation9] sm:$0xf]
    %v150 = vlaneseq
    %v151 = vshrl.u32 %v150, 7
    %v152 = vsub.s32 0, %v151
    %v153 = vrot.slane %v148, %v152
    %v154 = vlaneseq
    %v155 = vshrl.u32 %v154, 7
    %v156 = vsub.s32 1, %v155
    %v157 = vrot.slane %v148, %v156
    %v158 = vlaneseq
    %v159 = vshrl.u32 %v158, 7
    %v160 = vsub.s32 2, %v159
    %v161 = vrot.slane %v148, %v160
    %v162 = vlaneseq
    %v163 = vshrl.u32 %v162, 7
    %v164 = vsub.s32 3, %v163
    %v165 = vrot.slane %v148, %v164
    %v202 = vunpack.c.l.b16 %v116
    %v203 = vunpack.c.h.b16 %v116
    %v204 = vunpack.c.l.b16 %v117
    %v205 = vunpack.c.h.b16 %v117
    %v206 = vunpack.c.l.b16 %v118
    %v207 = vunpack.c.h.b16 %v118
    %v208 = vunpack.c.l.b16 %v119
    %v209 = vunpack.c.h.b16 %v119
    %v210 = vunpack.c.l.b16 %v120
    %v211 = vunpack.c.h.b16 %v120
    %v212 = vunpack.c.l.b16 %v121
    %v213 = vunpack.c.h.b16 %v121
    %v214 = vunpack.c.l.b16 %v122
    %v215 = vunpack.c.h.b16 %v122
    %v216 = vunpack.c.l.b16 %v123
    %v217 = vunpack.c.h.b16 %v123
    %v218 = vunpack.c.l.b16 %v124
    %v219 = vunpack.c.h.b16 %v124
    %v220 = vunpack.c.l.b16 %v125
    %v221 = vunpack.c.h.b16 %v125
    %v222 = vunpack.c.l.b16 %v126
    %v223 = vunpack.c.h.b16 %v126
    %v224 = vunpack.c.l.b16 %v127
    %v225 = vunpack.c.h.b16 %v127
    %v226 = vunpack.c.l.b16 %v128
    %v227 = vunpack.c.h.b16 %v128
    %v228 = vunpack.c.l.b16 %v129
    %v229 = vunpack.c.h.b16 %v129
    %v230 = vunpack.c.l.b16 %v130
    %v231 = vunpack.c.h.b16 %v130
    %v232 = vunpack.c.l.b16 %v131
    %v233 = vunpack.c.h.b16 %v131
    %v234 = vunpack.c.l.b16 %v132
    %v235 = vunpack.c.h.b16 %v132
    %v236 = vunpack.c.l.b16 %v133
    %v237 = vunpack.c.h.b16 %v133
    %v238 = vunpack.c.l.b16 %v134
    %v239 = vunpack.c.h.b16 %v134
    %v240 = vunpack.c.l.b16 %v135
    %v241 = vunpack.c.h.b16 %v135
    %v242 = vunpack.c.l.b16 %v136
    %v243 = vunpack.c.h.b16 %v136
    %v244 = vunpack.c.l.b16 %v137
    %v245 = vunpack.c.h.b16 %v137
    %v246 = vunpack.c.l.b16 %v138
    %v247 = vunpack.c.h.b16 %v138
    %v248 = vunpack.c.l.b16 %v139
    %v249 = vunpack.c.h.b16 %v139
    %v250 = vunpack.c.l.b16 %v140
    %v251 = vunpack.c.h.b16 %v140
    %v252 = vunpack.c.l.b16 %v141
    %v253 = vunpack.c.h.b16 %v141
    %v254 = vunpack.c.l.b16 %v142
    %v255 = vunpack.c.h.b16 %v142
    %v256 = vunpack.c.l.b16 %v143
    %v257 = vunpack.c.h.b16 %v143
    %v258 = vunpack.c.l.b16 %v144
    %v259 = vunpack.c.h.b16 %v144
    %v260 = vunpack.c.l.b16 %v145
    %v261 = vunpack.c.h.b16 %v145
    %v262 = vunpack.c.l.b16 %v146
    %v263 = vunpack.c.h.b16 %v146
    %v264 = vunpack.c.l.b16 %v147
    %v265 = vunpack.c.h.b16 %v147
    %v266 = vpack.c.b16 %v206, %v202
    %v267 = vpack.c.b16 %v207, %v203
    %v268 = vpack.c.b16 %v208, %v204
    %v269 = vpack.c.b16 %v209, %v205
    %v270 = vpack.c.b16 %v214, %v210
    %v271 = vpack.c.b16 %v215, %v211
    %v272 = vpack.c.b16 %v216, %v212
    %v273 = vpack.c.b16 %v217, %v213
    %v274 = vpack.c.b16 %v222, %v218
    %v275 = vpack.c.b16 %v223, %v219
    %v276 = vpack.c.b16 %v224, %v220
    %v277 = vpack.c.b16 %v225, %v221
    %v278 = vpack.c.b16 %v230, %v226
    %v279 = vpack.c.b16 %v231, %v227
    %v280 = vpack.c.b16 %v232, %v228
    %v281 = vpack.c.b16 %v233, %v229
    %v282 = vpack.c.b16 %v238, %v234
    %v283 = vpack.c.b16 %v239, %v235
    %v284 = vpack.c.b16 %v240, %v236
    %v285 = vpack.c.b16 %v241, %v237
    %v286 = vpack.c.b16 %v246, %v242
    %v287 = vpack.c.b16 %v247, %v243
    %v288 = vpack.c.b16 %v248, %v244
    %v289 = vpack.c.b16 %v249, %v245
    %v290 = vpack.c.b16 %v254, %v250
    %v291 = vpack.c.b16 %v255, %v251
    %v292 = vpack.c.b16 %v256, %v252
    %v293 = vpack.c.b16 %v257, %v253
    %v294 = vpack.c.b16 %v262, %v258
    %v295 = vpack.c.b16 %v263, %v259
    %v296 = vpack.c.b16 %v264, %v260
    %v297 = vpack.c.b16 %v265, %v261
    %330 = vmatprep.subr.bf16.mxu0 %v267
    %331 = vmatpush1.bf16.msra.mxu0 %v266
    %332 = vmatprep.subr.bf16.mxu0 %v271
    %333 = vmatpush1.bf16.msra.mxu0 %v270
    %334 = vmatprep.subr.bf16.mxu0 %v275
    %335 = vmatpush1.bf16.msra.mxu0 %v274
    %336 = vmatprep.subr.bf16.mxu0 %v279
    %337 = vmatpush1.bf16.msra.mxu0 %v278
    %338 = vmatprep.subr.bf16.mxu0 %v283
    %339 = vmatpush1.bf16.msra.mxu0 %v282
    %340 = vmatprep.subr.bf16.mxu0 %v287
    %341 = vmatpush1.bf16.msra.mxu0 %v286
    %342 = vmatprep.subr.bf16.mxu0 %v291
    %343 = vmatpush1.bf16.msra.mxu0 %v290
    %344 = vmatprep.subr.bf16.mxu0 %v295
    %345 = vmatpush1.bf16.msra.mxu0 %v294
    %346 = vmatprep.subr.bf16.mxu0 0
    %347 = vmatpush1.bf16.msra.mxu0 0
    %348 = vmatprep.subr.bf16.mxu0 0
    %349 = vmatpush1.bf16.msra.mxu0 0
    %350 = vmatprep.subr.bf16.mxu0 0
    %351 = vmatpush1.bf16.msra.mxu0 0
    %352 = vmatprep.subr.bf16.mxu0 0
    %353 = vmatpush1.bf16.msra.mxu0 0
    %354 = vmatprep.subr.bf16.mxu0 0
    %355 = vmatpush1.bf16.msra.mxu0 0
    %356 = vmatprep.subr.bf16.mxu0 0
    %357 = vmatpush1.bf16.msra.mxu0 0
    %358 = vmatprep.subr.bf16.mxu0 0
    %359 = vmatpush1.bf16.msra.mxu0 0
    %360 = vmatprep.subr.bf16.mxu0 0
    %361 = vmatpush1.bf16.msra.mxu0 0
    %362 = vmatprep.mubr.bf16.mxu0 0
    %363 = vmatmul.mubr.bf16.gmra.mrb[0].mxu0 %v115
    %v364 = vpop.f32.mrb[0].mxu0
    %v365 = vadd.f32 %v153, %v364
    %v366 = vpop.f32.mrb[0].mxu0
    %v367 = vadd.f32 %v157, %v366
    %v368 = vpop.f32.mrb[0].mxu0
    %v369 = vpop.f32.mrb[0].mxu0
    %370 = vdwg.mxu0
    %371 = vmatprep.subr.bf16.mxu0 %v269
    %372 = vmatpush1.bf16.msra.mxu0 %v268
    %373 = vmatprep.subr.bf16.mxu0 %v273
    %374 = vmatpush1.bf16.msra.mxu0 %v272
    %375 = vmatprep.subr.bf16.mxu0 %v277
    %376 = vmatpush1.bf16.msra.mxu0 %v276
    %377 = vmatprep.subr.bf16.mxu0 %v281
    %378 = vmatpush1.bf16.msra.mxu0 %v280
    %379 = vmatprep.subr.bf16.mxu0 %v285
    %380 = vmatpush1.bf16.msra.mxu0 %v284
    %381 = vmatprep.subr.bf16.mxu0 %v289
    %382 = vmatpush1.bf16.msra.mxu0 %v288
    %383 = vmatprep.subr.bf16.mxu0 %v293
    %384 = vmatpush1.bf16.msra.mxu0 %v292
    %385 = vmatprep.subr.bf16.mxu0 %v297
    %386 = vmatpush1.bf16.msra.mxu0 %v296
    %387 = vmatprep.subr.bf16.mxu0 0
    %388 = vmatpush1.bf16.msra.mxu0 0
    %389 = vmatprep.subr.bf16.mxu0 0
    %390 = vmatpush1.bf16.msra.mxu0 0
    %391 = vmatprep.subr.bf16.mxu0 0
    %392 = vmatpush1.bf16.msra.mxu0 0
    %393 = vmatprep.subr.bf16.mxu0 0
    %394 = vmatpush1.bf16.msra.mxu0 0
    %395 = vmatprep.subr.bf16.mxu0 0
    %396 = vmatpush1.bf16.msra.mxu0 0
    %397 = vmatprep.subr.bf16.mxu0 0
    %398 = vmatpush1.bf16.msra.mxu0 0
    %399 = vmatprep.subr.bf16.mxu0 0
    %400 = vmatpush1.bf16.msra.mxu0 0
    %401 = vmatprep.subr.bf16.mxu0 0
    %402 = vmatpush1.bf16.msra.mxu0 0
    %403 = vmatprep.mubr.bf16.mxu0 0
    %404 = vmatmul.mubr.bf16.gmra.mrb[0].mxu0 %v115
    %v405 = vpop.f32.mrb[0].mxu0
    %v406 = vadd.f32 %v161, %v405
    %v407 = vpop.f32.mrb[0].mxu0
    %v408 = vadd.f32 %v165, %v407
    %v409 = vpop.f32.mrb[0].mxu0
    %v410 = vpop.f32.mrb[0].mxu0
    %411 = vdwg.mxu0
    %v412 = vmax.f32 %v365, 0.0
    %v413 = vmax.f32 %v367, 0.0
    %v414 = vmax.f32 %v406, 0.0
    %v415 = vmax.f32 %v408, 0.0
    %v416 = vpack.c.bf16 %v412, %v412
    %v417 = vpack.c.bf16 %v413, %v413
    %v418 = vpack.c.bf16 %v414, %v414
    %v419 = vpack.c.bf16 %v415, %v415
    %v424 = vunpack.c.l.b16 %v416
    %v425 = vunpack.c.l.b16 %v417
    %v426 = vunpack.c.l.b16 %v418
    %v427 = vunpack.c.l.b16 %v419
    %v428 = vpack.c.b16 %v425, %v424
    %v429 = vpack.c.b16 %v427, %v426
    %432 = vst [vmem:[#allocation2] sm:$0xff] %v428
    %433 = vst [vmem:[#allocation2 + $0x8] sm:$0xff] %v429
    %v434 = vld [vmem:[#allocation2] sm:$0xff]
    %v435 = vld [vmem:[#allocation2 + $0x8] sm:$0xff]
    %v436 = vld [vmem:[#allocation10] sm:$0xff]
    %v437 = vld [vmem:[#allocation10 + $0x8] sm:$0xf]
    %v438 = vld [vmem:[#allocation10 + $0xc] sm:$0xff]
    %v439 = vld [vmem:[#allocation10 + $0x14] sm:$0xf]
    %v440 = vld [vmem:[#allocation10 + $0x18] sm:$0xff]
    %v441 = vld [vmem:[#allocation10 + $0x20] sm:$0xf]
    %v442 = vld [vmem:[#allocation10 + $0x24] sm:$0xff]
    %v443 = vld [vmem:[#allocation10 + $0x2c] sm:$0xf]
    %v444 = vld [vmem:[#allocation10 + $0x30] sm:$0xff]
    %v445 = vld [vmem:[#allocation10 + $0x38] sm:$0xf]
    %v446 = vld [vmem:[#allocation10 + $0x3c] sm:$0xff]
    %v447 = vld [vmem:[#allocation10 + $0x44] sm:$0xf]
    %v448 = vld [vmem:[#allocation10 + $0x48] sm:$0xff]
    %v449 = vld [vmem:[#allocation10 + $0x50] sm:$0xf]
    %v450 = vld [vmem:[#allocation10 + $0x54] sm:$0xff]
    %v451 = vld [vmem:[#allocation10 + $0x5c] sm:$0xf]
    %v452 = vld [vmem:[#allocation10 + $0x60] sm:$0xff]
    %v453 = vld [vmem:[#allocation10 + $0x68] sm:$0xf]
    %v454 = vld [vmem:[#allocation10 + $0x6c] sm:$0xff]
    %v455 = vld [vmem:[#allocation10 + $0x74] sm:$0xf]
    %v456 = vld [vmem:[#allocation10 + $0x78] sm:$0xff]
    %v457 = vld [vmem:[#allocation10 + $0x80] sm:$0xf]
    %v458 = vld [vmem:[#allocation10 + $0x84] sm:$0xff]
    %v459 = vld [vmem:[#allocation10 + $0x8c] sm:$0xf]
    %v460 = vld [vmem:[#allocation10 + $0x90] sm:$0xff]
    %v461 = vld [vmem:[#allocation10 + $0x98] sm:$0xf]
    %v462 = vld [vmem:[#allocation10 + $0x9c] sm:$0xff]
    %v463 = vld [vmem:[#allocation10 + $0xa4] sm:$0xf]
    %v464 = vld [vmem:[#allocation10 + $0xa8] sm:$0xff]
    %v465 = vld [vmem:[#allocation10 + $0xb0] sm:$0xf]
    %v466 = vld [vmem:[#allocation10 + $0xb4] sm:$0xff]
    %v467 = vld [vmem:[#allocation10 + $0xbc] sm:$0xf]
    %v468 = vld [vmem:[#allocation10 + $0xc0] sm:$0xff]
    %v469 = vld [vmem:[#allocation10 + $0xc8] sm:$0xf]
    %v470 = vld [vmem:[#allocation10 + $0xcc] sm:$0xff]
    %v471 = vld [vmem:[#allocation10 + $0xd4] sm:$0xf]
    %v472 = vld [vmem:[#allocation10 + $0xd8] sm:$0xff]
    %v473 = vld [vmem:[#allocation10 + $0xe0] sm:$0xf]
    %v474 = vld [vmem:[#allocation10 + $0xe4] sm:$0xff]
    %v475 = vld [vmem:[#allocation10 + $0xec] sm:$0xf]
    %v476 = vld [vmem:[#allocation10 + $0xf0] sm:$0xff]
    %v477 = vld [vmem:[#allocation10 + $0xf8] sm:$0xf]
    %v478 = vld [vmem:[#allocation10 + $0xfc] sm:$0xff]
    %v479 = vld [vmem:[#allocation10 + $0x104] sm:$0xf]
    %v480 = vld [vmem:[#allocation10 + $0x108] sm:$0xff]
    %v481 = vld [vmem:[#allocation10 + $0x110] sm:$0xf]
    %v482 = vld [vmem:[#allocation10 + $0x114] sm:$0xff]
    %v483 = vld [vmem:[#allocation10 + $0x11c] sm:$0xf]
    %v484 = vld [vmem:[#allocation10 + $0x120] sm:$0xff]
    %v485 = vld [vmem:[#allocation10 + $0x128] sm:$0xf]
    %v486 = vld [vmem:[#allocation10 + $0x12c] sm:$0xff]
    %v487 = vld [vmem:[#allocation10 + $0x134] sm:$0xf]
    %v488 = vld [vmem:[#allocation10 + $0x138] sm:$0xff]
    %v489 = vld [vmem:[#allocation10 + $0x140] sm:$0xf]
    %v490 = vld [vmem:[#allocation10 + $0x144] sm:$0xff]
    %v491 = vld [vmem:[#allocation10 + $0x14c] sm:$0xf]
    %v492 = vld [vmem:[#allocation10 + $0x150] sm:$0xff]
    %v493 = vld [vmem:[#allocation10 + $0x158] sm:$0xf]
    %v494 = vld [vmem:[#allocation10 + $0x15c] sm:$0xff]
    %v495 = vld [vmem:[#allocation10 + $0x164] sm:$0xf]
    %v496 = vld [vmem:[#allocation10 + $0x168] sm:$0xff]
    %v497 = vld [vmem:[#allocation10 + $0x170] sm:$0xf]
    %v498 = vld [vmem:[#allocation10 + $0x174] sm:$0xff]
    %v499 = vld [vmem:[#allocation10 + $0x17c] sm:$0xf]
    %v500 = vld [vmem:[#allocation10 + $0x180] sm:$0xff]
    %v501 = vld [vmem:[#allocation10 + $0x188] sm:$0xf]
    %v502 = vld [vmem:[#allocation10 + $0x18c] sm:$0xff]
    %v503 = vld [vmem:[#allocation10 + $0x194] sm:$0xf]
    %v504 = vld [vmem:[#allocation10 + $0x198] sm:$0xff]
    %v505 = vld [vmem:[#allocation10 + $0x1a0] sm:$0xf]
    %v506 = vld [vmem:[#allocation10 + $0x1a4] sm:$0xff]
    %v507 = vld [vmem:[#allocation10 + $0x1ac] sm:$0xf]
    %v508 = vld [vmem:[#allocation10 + $0x1b0] sm:$0xff]
    %v509 = vld [vmem:[#allocation10 + $0x1b8] sm:$0xf]
    %v510 = vld [vmem:[#allocation10 + $0x1bc] sm:$0xff]
    %v511 = vld [vmem:[#allocation10 + $0x1c4] sm:$0xf]
    %v512 = vld [vmem:[#allocation10 + $0x1c8] sm:$0xff]
    %v513 = vld [vmem:[#allocation10 + $0x1d0] sm:$0xf]
    %v514 = vld [vmem:[#allocation10 + $0x1d4] sm:$0xff]
    %v515 = vld [vmem:[#allocation10 + $0x1dc] sm:$0xf]
    %v516 = vld [vmem:[#allocation10 + $0x1e0] sm:$0xff]
    %v517 = vld [vmem:[#allocation10 + $0x1e8] sm:$0xf]
    %v518 = vld [vmem:[#allocation10 + $0x1ec] sm:$0xff]
    %v519 = vld [vmem:[#allocation10 + $0x1f4] sm:$0xf]
    %v520 = vld [vmem:[#allocation10 + $0x1f8] sm:$0xff]
    %v521 = vld [vmem:[#allocation10 + $0x200] sm:$0xf]
    %v522 = vld [vmem:[#allocation10 + $0x204] sm:$0xff]
    %v523 = vld [vmem:[#allocation10 + $0x20c] sm:$0xf]
    %v524 = vld [vmem:[#allocation10 + $0x210] sm:$0xff]
    %v525 = vld [vmem:[#allocation10 + $0x218] sm:$0xf]
    %v526 = vld [vmem:[#allocation10 + $0x21c] sm:$0xff]
    %v527 = vld [vmem:[#allocation10 + $0x224] sm:$0xf]
    %v528 = vld [vmem:[#allocation10 + $0x228] sm:$0xff]
    %v529 = vld [vmem:[#allocation10 + $0x230] sm:$0xf]
    %v530 = vld [vmem:[#allocation10 + $0x234] sm:$0xff]
    %v531 = vld [vmem:[#allocation10 + $0x23c] sm:$0xf]
    %v532 = vld [vmem:[#allocation10 + $0x240] sm:$0xff]
    %v533 = vld [vmem:[#allocation10 + $0x248] sm:$0xf]
    %v534 = vld [vmem:[#allocation10 + $0x24c] sm:$0xff]
    %v535 = vld [vmem:[#allocation10 + $0x254] sm:$0xf]
    %v536 = vld [vmem:[#allocation10 + $0x258] sm:$0xff]
    %v537 = vld [vmem:[#allocation10 + $0x260] sm:$0xf]
    %v538 = vld [vmem:[#allocation10 + $0x264] sm:$0xff]
    %v539 = vld [vmem:[#allocation10 + $0x26c] sm:$0xf]
    %v540 = vld [vmem:[#allocation10 + $0x270] sm:$0xff]
    %v541 = vld [vmem:[#allocation10 + $0x278] sm:$0xf]
    %v542 = vld [vmem:[#allocation10 + $0x27c] sm:$0xff]
    %v543 = vld [vmem:[#allocation10 + $0x284] sm:$0xf]
    %v544 = vld [vmem:[#allocation10 + $0x288] sm:$0xff]
    %v545 = vld [vmem:[#allocation10 + $0x290] sm:$0xf]
    %v546 = vld [vmem:[#allocation10 + $0x294] sm:$0xff]
    %v547 = vld [vmem:[#allocation10 + $0x29c] sm:$0xf]
    %v548 = vld [vmem:[#allocation10 + $0x2a0] sm:$0xff]
    %v549 = vld [vmem:[#allocation10 + $0x2a8] sm:$0xf]
    %v550 = vld [vmem:[#allocation10 + $0x2ac] sm:$0xff]
    %v551 = vld [vmem:[#allocation10 + $0x2b4] sm:$0xf]
    %v552 = vld [vmem:[#allocation10 + $0x2b8] sm:$0xff]
    %v553 = vld [vmem:[#allocation10 + $0x2c0] sm:$0xf]
    %v554 = vld [vmem:[#allocation10 + $0x2c4] sm:$0xff]
    %v555 = vld [vmem:[#allocation10 + $0x2cc] sm:$0xf]
    %v556 = vld [vmem:[#allocation10 + $0x2d0] sm:$0xff]
    %v557 = vld [vmem:[#allocation10 + $0x2d8] sm:$0xf]
    %v558 = vld [vmem:[#allocation10 + $0x2dc] sm:$0xff]
    %v559 = vld [vmem:[#allocation10 + $0x2e4] sm:$0xf]
    %v560 = vld [vmem:[#allocation10 + $0x2e8] sm:$0xff]
    %v561 = vld [vmem:[#allocation10 + $0x2f0] sm:$0xf]
    %v562 = vld [vmem:[#allocation10 + $0x2f4] sm:$0xff]
    %v563 = vld [vmem:[#allocation10 + $0x2fc] sm:$0xf]
    %v564 = vld [vmem:[#allocation12] sm:$0x7]
    %v566 = vlaneseq
    %v567 = vshrl.u32 %v566, 7
    %v568 = vsub.s32 0, %v567
    %v569 = vrot.slane %v564, %v568
    %v570 = vlaneseq
    %v571 = vshrl.u32 %v570, 7
    %v572 = vsub.s32 1, %v571
    %v573 = vrot.slane %v564, %v572
    %v574 = vlaneseq
    %v575 = vshrl.u32 %v574, 7
    %v576 = vsub.s32 2, %v575
    %v577 = vrot.slane %v564, %v576
    %v583 = vunpack.c.l.b16 %v434
    %v584 = vunpack.c.h.b16 %v434
    %v585 = vunpack.c.l.b16 %v435
    %v586 = vunpack.c.h.b16 %v435
    %v587 = vpack.c.b16 %v583, %v583
    %v588 = vpack.c.b16 %v584, %v584
    %v589 = vpack.c.b16 %v585, %v585
    %v590 = vpack.c.b16 %v586, %v586
    %v723 = vunpack.c.l.b16 %v436
    %v724 = vunpack.c.h.b16 %v436
    %v725 = vunpack.c.l.b16 %v437
    %v726 = vunpack.c.l.b16 %v438
    %v727 = vunpack.c.h.b16 %v438
    %v728 = vunpack.c.l.b16 %v439
    %v729 = vunpack.c.l.b16 %v440
    %v730 = vunpack.c.h.b16 %v440
    %v731 = vunpack.c.l.b16 %v441
    %v732 = vunpack.c.l.b16 %v442
    %v733 = vunpack.c.h.b16 %v442
    %v734 = vunpack.c.l.b16 %v443
    %v735 = vunpack.c.l.b16 %v444
    %v736 = vunpack.c.h.b16 %v444
    %v737 = vunpack.c.l.b16 %v445
    %v738 = vunpack.c.l.b16 %v446
    %v739 = vunpack.c.h.b16 %v446
    %v740 = vunpack.c.l.b16 %v447
    %v741 = vunpack.c.l.b16 %v448
    %v742 = vunpack.c.h.b16 %v448
    %v743 = vunpack.c.l.b16 %v449
    %v744 = vunpack.c.l.b16 %v450
    %v745 = vunpack.c.h.b16 %v450
    %v746 = vunpack.c.l.b16 %v451
    %v747 = vunpack.c.l.b16 %v452
    %v748 = vunpack.c.h.b16 %v452
    %v749 = vunpack.c.l.b16 %v453
    %v750 = vunpack.c.l.b16 %v454
    %v751 = vunpack.c.h.b16 %v454
    %v752 = vunpack.c.l.b16 %v455
    %v753 = vunpack.c.l.b16 %v456
    %v754 = vunpack.c.h.b16 %v456
    %v755 = vunpack.c.l.b16 %v457
    %v756 = vunpack.c.l.b16 %v458
    %v757 = vunpack.c.h.b16 %v458
    %v758 = vunpack.c.l.b16 %v459
    %v759 = vunpack.c.l.b16 %v460
    %v760 = vunpack.c.h.b16 %v460
    %v761 = vunpack.c.l.b16 %v461
    %v762 = vunpack.c.l.b16 %v462
    %v763 = vunpack.c.h.b16 %v462
    %v764 = vunpack.c.l.b16 %v463
    %v765 = vunpack.c.l.b16 %v464
    %v766 = vunpack.c.h.b16 %v464
    %v767 = vunpack.c.l.b16 %v465
    %v768 = vunpack.c.l.b16 %v466
    %v769 = vunpack.c.h.b16 %v466
    %v770 = vunpack.c.l.b16 %v467
    %v771 = vunpack.c.l.b16 %v468
    %v772 = vunpack.c.h.b16 %v468
    %v773 = vunpack.c.l.b16 %v469
    %v774 = vunpack.c.l.b16 %v470
    %v775 = vunpack.c.h.b16 %v470
    %v776 = vunpack.c.l.b16 %v471
    %v777 = vunpack.c.l.b16 %v472
    %v778 = vunpack.c.h.b16 %v472
    %v779 = vunpack.c.l.b16 %v473
    %v780 = vunpack.c.l.b16 %v474
    %v781 = vunpack.c.h.b16 %v474
    %v782 = vunpack.c.l.b16 %v475
    %v783 = vunpack.c.l.b16 %v476
    %v784 = vunpack.c.h.b16 %v476
    %v785 = vunpack.c.l.b16 %v477
    %v786 = vunpack.c.l.b16 %v478
    %v787 = vunpack.c.h.b16 %v478
    %v788 = vunpack.c.l.b16 %v479
    %v789 = vunpack.c.l.b16 %v480
    %v790 = vunpack.c.h.b16 %v480
    %v791 = vunpack.c.l.b16 %v481
    %v792 = vunpack.c.l.b16 %v482
    %v793 = vunpack.c.h.b16 %v482
    %v794 = vunpack.c.l.b16 %v483
    %v795 = vunpack.c.l.b16 %v484
    %v796 = vunpack.c.h.b16 %v484
    %v797 = vunpack.c.l.b16 %v485
    %v798 = vunpack.c.l.b16 %v486
    %v799 = vunpack.c.h.b16 %v486
    %v800 = vunpack.c.l.b16 %v487
    %v801 = vunpack.c.l.b16 %v488
    %v802 = vunpack.c.h.b16 %v488
    %v803 = vunpack.c.l.b16 %v489
    %v804 = vunpack.c.l.b16 %v490
    %v805 = vunpack.c.h.b16 %v490
    %v806 = vunpack.c.l.b16 %v491
    %v807 = vunpack.c.l.b16 %v492
    %v808 = vunpack.c.h.b16 %v492
    %v809 = vunpack.c.l.b16 %v493
    %v810 = vunpack.c.l.b16 %v494
    %v811 = vunpack.c.h.b16 %v494
    %v812 = vunpack.c.l.b16 %v495
    %v813 = vunpack.c.l.b16 %v496
    %v814 = vunpack.c.h.b16 %v496
    %v815 = vunpack.c.l.b16 %v497
    %v816 = vunpack.c.l.b16 %v498
    %v817 = vunpack.c.h.b16 %v498
    %v818 = vunpack.c.l.b16 %v499
    %v819 = vunpack.c.l.b16 %v500
    %v820 = vunpack.c.h.b16 %v500
    %v821 = vunpack.c.l.b16 %v501
    %v822 = vunpack.c.l.b16 %v502
    %v823 = vunpack.c.h.b16 %v502
    %v824 = vunpack.c.l.b16 %v503
    %v825 = vunpack.c.l.b16 %v504
    %v826 = vunpack.c.h.b16 %v504
    %v827 = vunpack.c.l.b16 %v505
    %v828 = vunpack.c.l.b16 %v506
    %v829 = vunpack.c.h.b16 %v506
    %v830 = vunpack.c.l.b16 %v507
    %v831 = vunpack.c.l.b16 %v508
    %v832 = vunpack.c.h.b16 %v508
    %v833 = vunpack.c.l.b16 %v509
    %v834 = vunpack.c.l.b16 %v510
    %v835 = vunpack.c.h.b16 %v510
    %v836 = vunpack.c.l.b16 %v511
    %v837 = vunpack.c.l.b16 %v512
    %v838 = vunpack.c.h.b16 %v512
    %v839 = vunpack.c.l.b16 %v513
    %v840 = vunpack.c.l.b16 %v514
    %v841 = vunpack.c.h.b16 %v514
    %v842 = vunpack.c.l.b16 %v515
    %v843 = vunpack.c.l.b16 %v516
    %v844 = vunpack.c.h.b16 %v516
    %v845 = vunpack.c.l.b16 %v517
    %v846 = vunpack.c.l.b16 %v518
    %v847 = vunpack.c.h.b16 %v518
    %v848 = vunpack.c.l.b16 %v519
    %v849 = vunpack.c.l.b16 %v520
    %v850 = vunpack.c.h.b16 %v520
    %v851 = vunpack.c.l.b16 %v521
    %v852 = vunpack.c.l.b16 %v522
    %v853 = vunpack.c.h.b16 %v522
    %v854 = vunpack.c.l.b16 %v523
    %v855 = vunpack.c.l.b16 %v524
    %v856 = vunpack.c.h.b16 %v524
    %v857 = vunpack.c.l.b16 %v525
    %v858 = vunpack.c.l.b16 %v526
    %v859 = vunpack.c.h.b16 %v526
    %v860 = vunpack.c.l.b16 %v527
    %v861 = vunpack.c.l.b16 %v528
    %v862 = vunpack.c.h.b16 %v528
    %v863 = vunpack.c.l.b16 %v529
    %v864 = vunpack.c.l.b16 %v530
    %v865 = vunpack.c.h.b16 %v530
    %v866 = vunpack.c.l.b16 %v531
    %v867 = vunpack.c.l.b16 %v532
    %v868 = vunpack.c.h.b16 %v532
    %v869 = vunpack.c.l.b16 %v533
    %v870 = vunpack.c.l.b16 %v534
    %v871 = vunpack.c.h.b16 %v534
    %v872 = vunpack.c.l.b16 %v535
    %v873 = vunpack.c.l.b16 %v536
    %v874 = vunpack.c.h.b16 %v536
    %v875 = vunpack.c.l.b16 %v537
    %v876 = vunpack.c.l.b16 %v538
    %v877 = vunpack.c.h.b16 %v538
    %v878 = vunpack.c.l.b16 %v539
    %v879 = vunpack.c.l.b16 %v540
    %v880 = vunpack.c.h.b16 %v540
    %v881 = vunpack.c.l.b16 %v541
    %v882 = vunpack.c.l.b16 %v542
    %v883 = vunpack.c.h.b16 %v542
    %v884 = vunpack.c.l.b16 %v543
    %v885 = vunpack.c.l.b16 %v544
    %v886 = vunpack.c.h.b16 %v544
    %v887 = vunpack.c.l.b16 %v545
    %v888 = vunpack.c.l.b16 %v546
    %v889 = vunpack.c.h.b16 %v546
    %v890 = vunpack.c.l.b16 %v547
    %v891 = vunpack.c.l.b16 %v548
    %v892 = vunpack.c.h.b16 %v548
    %v893 = vunpack.c.l.b16 %v549
    %v894 = vunpack.c.l.b16 %v550
    %v895 = vunpack.c.h.b16 %v550
    %v896 = vunpack.c.l.b16 %v551
    %v897 = vunpack.c.l.b16 %v552
    %v898 = vunpack.c.h.b16 %v552
    %v899 = vunpack.c.l.b16 %v553
    %v900 = vunpack.c.l.b16 %v554
    %v901 = vunpack.c.h.b16 %v554
    %v902 = vunpack.c.l.b16 %v555
    %v903 = vunpack.c.l.b16 %v556
    %v904 = vunpack.c.h.b16 %v556
    %v905 = vunpack.c.l.b16 %v557
    %v906 = vunpack.c.l.b16 %v558
    %v907 = vunpack.c.h.b16 %v558
    %v908 = vunpack.c.l.b16 %v559
    %v909 = vunpack.c.l.b16 %v560
    %v910 = vunpack.c.h.b16 %v560
    %v911 = vunpack.c.l.b16 %v561
    %v912 = vunpack.c.l.b16 %v562
    %v913 = vunpack.c.h.b16 %v562
    %v914 = vunpack.c.l.b16 %v563
    %v915 = vpack.c.b16 %v726, %v723
    %v916 = vpack.c.b16 %v727, %v724
    %v917 = vpack.c.b16 %v728, %v725
    %v918 = vpack.c.b16 %v732, %v729
    %v919 = vpack.c.b16 %v733, %v730
    %v920 = vpack.c.b16 %v734, %v731
    %v921 = vpack.c.b16 %v738, %v735
    %v922 = vpack.c.b16 %v739, %v736
    %v923 = vpack.c.b16 %v740, %v737
    %v924 = vpack.c.b16 %v744, %v741
    %v925 = vpack.c.b16 %v745, %v742
    %v926 = vpack.c.b16 %v746, %v743
    %v927 = vpack.c.b16 %v750, %v747
    %v928 = vpack.c.b16 %v751, %v748
    %v929 = vpack.c.b16 %v752, %v749
    %v930 = vpack.c.b16 %v756, %v753
    %v931 = vpack.c.b16 %v757, %v754
    %v932 = vpack.c.b16 %v758, %v755
    %v933 = vpack.c.b16 %v762, %v759
    %v934 = vpack.c.b16 %v763, %v760
    %v935 = vpack.c.b16 %v764, %v761
    %v936 = vpack.c.b16 %v768, %v765
    %v937 = vpack.c.b16 %v769, %v766
    %v938 = vpack.c.b16 %v770, %v767
    %v939 = vpack.c.b16 %v774, %v771
    %v940 = vpack.c.b16 %v775, %v772
    %v941 = vpack.c.b16 %v776, %v773
    %v942 = vpack.c.b16 %v780, %v777
    %v943 = vpack.c.b16 %v781, %v778
    %v944 = vpack.c.b16 %v782, %v779
    %v945 = vpack.c.b16 %v786, %v783
    %v946 = vpack.c.b16 %v787, %v784
    %v947 = vpack.c.b16 %v788, %v785
    %v948 = vpack.c.b16 %v792, %v789
    %v949 = vpack.c.b16 %v793, %v790
    %v950 = vpack.c.b16 %v794, %v791
    %v951 = vpack.c.b16 %v798, %v795
    %v952 = vpack.c.b16 %v799, %v796
    %v953 = vpack.c.b16 %v800, %v797
    %v954 = vpack.c.b16 %v804, %v801
    %v955 = vpack.c.b16 %v805, %v802
    %v956 = vpack.c.b16 %v806, %v803
    %v957 = vpack.c.b16 %v810, %v807
    %v958 = vpack.c.b16 %v811, %v808
    %v959 = vpack.c.b16 %v812, %v809
    %v960 = vpack.c.b16 %v816, %v813
    %v961 = vpack.c.b16 %v817, %v814
    %v962 = vpack.c.b16 %v818, %v815
    %v963 = vpack.c.b16 %v822, %v819
    %v964 = vpack.c.b16 %v823, %v820
    %v965 = vpack.c.b16 %v824, %v821
    %v966 = vpack.c.b16 %v828, %v825
    %v967 = vpack.c.b16 %v829, %v826
    %v968 = vpack.c.b16 %v830, %v827
    %v969 = vpack.c.b16 %v834, %v831
    %v970 = vpack.c.b16 %v835, %v832
    %v971 = vpack.c.b16 %v836, %v833
    %v972 = vpack.c.b16 %v840, %v837
    %v973 = vpack.c.b16 %v841, %v838
    %v974 = vpack.c.b16 %v842, %v839
    %v975 = vpack.c.b16 %v846, %v843
    %v976 = vpack.c.b16 %v847, %v844
    %v977 = vpack.c.b16 %v848, %v845
    %v978 = vpack.c.b16 %v852, %v849
    %v979 = vpack.c.b16 %v853, %v850
    %v980 = vpack.c.b16 %v854, %v851
    %v981 = vpack.c.b16 %v858, %v855
    %v982 = vpack.c.b16 %v859, %v856
    %v983 = vpack.c.b16 %v860, %v857
    %v984 = vpack.c.b16 %v864, %v861
    %v985 = vpack.c.b16 %v865, %v862
    %v986 = vpack.c.b16 %v866, %v863
    %v987 = vpack.c.b16 %v870, %v867
    %v988 = vpack.c.b16 %v871, %v868
    %v989 = vpack.c.b16 %v872, %v869
    %v990 = vpack.c.b16 %v876, %v873
    %v991 = vpack.c.b16 %v877, %v874
    %v992 = vpack.c.b16 %v878, %v875
    %v993 = vpack.c.b16 %v882, %v879
    %v994 = vpack.c.b16 %v883, %v880
    %v995 = vpack.c.b16 %v884, %v881
    %v996 = vpack.c.b16 %v888, %v885
    %v997 = vpack.c.b16 %v889, %v886
    %v998 = vpack.c.b16 %v890, %v887
    %v999 = vpack.c.b16 %v894, %v891
    %v1000 = vpack.c.b16 %v895, %v892
    %v1001 = vpack.c.b16 %v896, %v893
    %v1002 = vpack.c.b16 %v900, %v897
    %v1003 = vpack.c.b16 %v901, %v898
    %v1004 = vpack.c.b16 %v902, %v899
    %v1005 = vpack.c.b16 %v906, %v903
    %v1006 = vpack.c.b16 %v907, %v904
    %v1007 = vpack.c.b16 %v908, %v905
    %v1008 = vpack.c.b16 %v912, %v909
    %v1009 = vpack.c.b16 %v913, %v910
    %v1010 = vpack.c.b16 %v914, %v911
    %1107 = vmatprep.subr.bf16.mxu0 %v916
    %1108 = vmatpush1.bf16.msra.mxu0 %v915
    %1109 = vmatprep.subr.bf16.mxu0 %v919
    %1110 = vmatpush1.bf16.msra.mxu0 %v918
    %1111 = vmatprep.subr.bf16.mxu0 %v922
    %1112 = vmatpush1.bf16.msra.mxu0 %v921
    %1113 = vmatprep.subr.bf16.mxu0 %v925
    %1114 = vmatpush1.bf16.msra.mxu0 %v924
    %1115 = vmatprep.subr.bf16.mxu0 %v928
    %1116 = vmatpush1.bf16.msra.mxu0 %v927
    %1117 = vmatprep.subr.bf16.mxu0 %v931
    %1118 = vmatpush1.bf16.msra.mxu0 %v930
    %1119 = vmatprep.subr.bf16.mxu0 %v934
    %1120 = vmatpush1.bf16.msra.mxu0 %v933
    %1121 = vmatprep.subr.bf16.mxu0 %v937
    %1122 = vmatpush1.bf16.msra.mxu0 %v936
    %1123 = vmatprep.subr.bf16.mxu0 %v940
    %1124 = vmatpush1.bf16.msra.mxu0 %v939
    %1125 = vmatprep.subr.bf16.mxu0 %v943
    %1126 = vmatpush1.bf16.msra.mxu0 %v942
    %1127 = vmatprep.subr.bf16.mxu0 %v946
    %1128 = vmatpush1.bf16.msra.mxu0 %v945
    %1129 = vmatprep.subr.bf16.mxu0 %v949
    %1130 = vmatpush1.bf16.msra.mxu0 %v948
    %1131 = vmatprep.subr.bf16.mxu0 %v952
    %1132 = vmatpush1.bf16.msra.mxu0 %v951
    %1133 = vmatprep.subr.bf16.mxu0 %v955
    %1134 = vmatpush1.bf16.msra.mxu0 %v954
    %1135 = vmatprep.subr.bf16.mxu0 %v958
    %1136 = vmatpush1.bf16.msra.mxu0 %v957
    %1137 = vmatprep.subr.bf16.mxu0 %v961
    %1138 = vmatpush1.bf16.msra.mxu0 %v960
    %1139 = vmatprep.mubr.bf16.mxu0 %v588
    %1140 = vmatmul.mubr.bf16.gmra.mrb[0].mxu0 %v587
    %v1141 = vpop.f32.mrb[0].mxu0
    %v1142 = vadd.f32 %v569, %v1141
    %v1143 = vpop.f32.mrb[0].mxu0
    %v1144 = vadd.f32 %v573, %v1143
    %v1145 = vpop.f32.mrb[0].mxu0
    %v1146 = vpop.f32.mrb[0].mxu0
    %1147 = vdwg.mxu0
    %1148 = vmatprep.subr.bf16.mxu0 %v964
    %1149 = vmatpush1.bf16.msra.mxu0 %v963
    %1150 = vmatprep.subr.bf16.mxu0 %v967
    %1151 = vmatpush1.bf16.msra.mxu0 %v966
    %1152 = vmatprep.subr.bf16.mxu0 %v970
    %1153 = vmatpush1.bf16.msra.mxu0 %v969
    %1154 = vmatprep.subr.bf16.mxu0 %v973
    %1155 = vmatpush1.bf16.msra.mxu0 %v972
    %1156 = vmatprep.subr.bf16.mxu0 %v976
    %1157 = vmatpush1.bf16.msra.mxu0 %v975
    %1158 = vmatprep.subr.bf16.mxu0 %v979
    %1159 = vmatpush1.bf16.msra.mxu0 %v978
    %1160 = vmatprep.subr.bf16.mxu0 %v982
    %1161 = vmatpush1.bf16.msra.mxu0 %v981
    %1162 = vmatprep.subr.bf16.mxu0 %v985
    %1163 = vmatpush1.bf16.msra.mxu0 %v984
    %1164 = vmatprep.subr.bf16.mxu0 %v988
    %1165 = vmatpush1.bf16.msra.mxu0 %v987
    %1166 = vmatprep.subr.bf16.mxu0 %v991
    %1167 = vmatpush1.bf16.msra.mxu0 %v990
    %1168 = vmatprep.subr.bf16.mxu0 %v994
    %1169 = vmatpush1.bf16.msra.mxu0 %v993
    %1170 = vmatprep.subr.bf16.mxu0 %v997
    %1171 = vmatpush1.bf16.msra.mxu0 %v996
    %1172 = vmatprep.subr.bf16.mxu0 %v1000
    %1173 = vmatpush1.bf16.msra.mxu0 %v999
    %1174 = vmatprep.subr.bf16.mxu0 %v1003
    %1175 = vmatpush1.bf16.msra.mxu0 %v1002
    %1176 = vmatprep.subr.bf16.mxu0 %v1006
    %1177 = vmatpush1.bf16.msra.mxu0 %v1005
    %1178 = vmatprep.subr.bf16.mxu0 %v1009
    %1179 = vmatpush1.bf16.msra.mxu0 %v1008
    %1180 = vmatprep.mubr.bf16.mxu0 %v590
    %1181 = vmatmul.mubr.bf16.gmra.mrb[0].mxu0 %v589
    %v1182 = vpop.f32.mrb[0].mxu0
    %v1183 = vadd.f32 %v1142, %v1182
    %v1184 = vpop.f32.mrb[0].mxu0
    %v1185 = vadd.f32 %v1144, %v1184
    %v1186 = vpop.f32.mrb[0].mxu0
    %v1187 = vpop.f32.mrb[0].mxu0
    %1188 = vdwg.mxu0
    %1189 = vmatprep.subr.bf16.mxu0 0
    %1190 = vmatpush1.bf16.msra.mxu0 %v917
    %1191 = vmatprep.subr.bf16.mxu0 0
    %1192 = vmatpush1.bf16.msra.mxu0 %v920
    %1193 = vmatprep.subr.bf16.mxu0 0
    %1194 = vmatpush1.bf16.msra.mxu0 %v923
    %1195 = vmatprep.subr.bf16.mxu0 0
    %1196 = vmatpush1.bf16.msra.mxu0 %v926
    %1197 = vmatprep.subr.bf16.mxu0 0
    %1198 = vmatpush1.bf16.msra.mxu0 %v929
    %1199 = vmatprep.subr.bf16.mxu0 0
    %1200 = vmatpush1.bf16.msra.mxu0 %v932
    %1201 = vmatprep.subr.bf16.mxu0 0
    %1202 = vmatpush1.bf16.msra.mxu0 %v935
    %1203 = vmatprep.subr.bf16.mxu0 0
    %1204 = vmatpush1.bf16.msra.mxu0 %v938
    %1205 = vmatprep.subr.bf16.mxu0 0
    %1206 = vmatpush1.bf16.msra.mxu0 %v941
    %1207 = vmatprep.subr.bf16.mxu0 0
    %1208 = vmatpush1.bf16.msra.mxu0 %v944
    %1209 = vmatprep.subr.bf16.mxu0 0
    %1210 = vmatpush1.bf16.msra.mxu0 %v947
    %1211 = vmatprep.subr.bf16.mxu0 0
    %1212 = vmatpush1.bf16.msra.mxu0 %v950
    %1213 = vmatprep.subr.bf16.mxu0 0
    %1214 = vmatpush1.bf16.msra.mxu0 %v953
    %1215 = vmatprep.subr.bf16.mxu0 0
    %1216 = vmatpush1.bf16.msra.mxu0 %v956
    %1217 = vmatprep.subr.bf16.mxu0 0
    %1218 = vmatpush1.bf16.msra.mxu0 %v959
    %1219 = vmatprep.subr.bf16.mxu0 0
    %1220 = vmatpush1.bf16.msra.mxu0 %v962
    %1221 = vmatprep.mubr.bf16.mxu0 %v588
    %1222 = vmatmul.mubr.bf16.gmra.mrb[0].mxu0 %v587
    %v1223 = vpop.f32.mrb[0].mxu0
    %v1224 = vadd.f32 %v577, %v1223
    %v1225 = vpop.f32.mrb[0].mxu0
    %v1226 = vpop.f32.mrb[0].mxu0
    %v1227 = vpop.f32.mrb[0].mxu0
    %1228 = vdwg.mxu0
    %1229 = vmatprep.subr.bf16.mxu0 0
    %1230 = vmatpush1.bf16.msra.mxu0 %v965
    %1231 = vmatprep.subr.bf16.mxu0 0
    %1232 = vmatpush1.bf16.msra.mxu0 %v968
    %1233 = vmatprep.subr.bf16.mxu0 0
    %1234 = vmatpush1.bf16.msra.mxu0 %v971
    %1235 = vmatprep.subr.bf16.mxu0 0
    %1236 = vmatpush1.bf16.msra.mxu0 %v974
    %1237 = vmatprep.subr.bf16.mxu0 0
    %1238 = vmatpush1.bf16.msra.mxu0 %v977
    %1239 = vmatprep.subr.bf16.mxu0 0
    %1240 = vmatpush1.bf16.msra.mxu0 %v980
    %1241 = vmatprep.subr.bf16.mxu0 0
    %1242 = vmatpush1.bf16.msra.mxu0 %v983
    %1243 = vmatprep.subr.bf16.mxu0 0
    %1244 = vmatpush1.bf16.msra.mxu0 %v986
    %1245 = vmatprep.subr.bf16.mxu0 0
    %1246 = vmatpush1.bf16.msra.mxu0 %v989
    %1247 = vmatprep.subr.bf16.mxu0 0
    %1248 = vmatpush1.bf16.msra.mxu0 %v992
    %1249 = vmatprep.subr.bf16.mxu0 0
    %1250 = vmatpush1.bf16.msra.mxu0 %v995
    %1251 = vmatprep.subr.bf16.mxu0 0
    %1252 = vmatpush1.bf16.msra.mxu0 %v998
    %1253 = vmatprep.subr.bf16.mxu0 0
    %1254 = vmatpush1.bf16.msra.mxu0 %v1001
    %1255 = vmatprep.subr.bf16.mxu0 0
    %1256 = vmatpush1.bf16.msra.mxu0 %v1004
    %1257 = vmatprep.subr.bf16.mxu0 0
    %1258 = vmatpush1.bf16.msra.mxu0 %v1007
    %1259 = vmatprep.subr.bf16.mxu0 0
    %1260 = vmatpush1.bf16.msra.mxu0 %v1010
    %1261 = vmatprep.mubr.bf16.mxu0 %v590
    %1262 = vmatmul.mubr.bf16.gmra.mrb[0].mxu0 %v589
    %v1263 = vpop.f32.mrb[0].mxu0
    %v1264 = vadd.f32 %v1224, %v1263
    %v1265 = vpop.f32.mrb[0].mxu0
    %v1266 = vpop.f32.mrb[0].mxu0
    %v1267 = vpop.f32.mrb[0].mxu0
    %1268 = vdwg.mxu0
    %v1269 = vmax.f32 %v1183, 0.0
    %v1270 = vmax.f32 %v1185, 0.0
    %v1271 = vmax.f32 %v1264, 0.0
    %v1272 = vpack.c.bf16 %v1269, %v1269
    %v1273 = vpack.c.bf16 %v1270, %v1270
    %v1274 = vpack.c.bf16 %v1271, %v1271
    %v1278 = vunpack.c.l.b16 %v1272
    %v1279 = vunpack.c.l.b16 %v1273
    %v1280 = vunpack.c.l.b16 %v1274
    %v1281 = vpack.c.b16 %v1279, %v1278
    %v1282 = vpack.c.b16 %v1280, %v1280
    %1285 = vst [vmem:[#allocation3] sm:$0xff] %v1281
    %1286 = vst [vmem:[#allocation3 + $0x8] sm:$0xf] %v1282
    %v1287 = vld [vmem:[#allocation3] sm:$0xff]
    %v1288 = vld [vmem:[#allocation3 + $0x8] sm:$0xf]
    %v1289 = vld [vmem:[#allocation13] sm:$0xf]
    %v1290 = vld [vmem:[#allocation13 + $0x4] sm:$0xf]
    %v1291 = vld [vmem:[#allocation13 + $0x8] sm:$0xf]
    %v1292 = vld [vmem:[#allocation13 + $0xc] sm:$0xf]
    %v1293 = vld [vmem:[#allocation13 + $0x10] sm:$0xf]
    %v1294 = vld [vmem:[#allocation13 + $0x14] sm:$0xf]
    %v1295 = vld [vmem:[#allocation13 + $0x18] sm:$0xf]
    %v1296 = vld [vmem:[#allocation13 + $0x1c] sm:$0xf]
    %v1297 = vld [vmem:[#allocation13 + $0x20] sm:$0xf]
    %v1298 = vld [vmem:[#allocation13 + $0x24] sm:$0xf]
    %v1299 = vld [vmem:[#allocation13 + $0x28] sm:$0xf]
    %v1300 = vld [vmem:[#allocation13 + $0x2c] sm:$0xf]
    %v1301 = vld [vmem:[#allocation13 + $0x30] sm:$0xf]
    %v1302 = vld [vmem:[#allocation13 + $0x34] sm:$0xf]
    %v1303 = vld [vmem:[#allocation13 + $0x38] sm:$0xf]
    %v1304 = vld [vmem:[#allocation13 + $0x3c] sm:$0xf]
    %v1305 = vld [vmem:[#allocation13 + $0x40] sm:$0xf]
    %v1306 = vld [vmem:[#allocation13 + $0x44] sm:$0xf]
    %v1307 = vld [vmem:[#allocation13 + $0x48] sm:$0xf]
    %v1308 = vld [vmem:[#allocation13 + $0x4c] sm:$0xf]
    %v1309 = vld [vmem:[#allocation13 + $0x50] sm:$0xf]
    %v1310 = vld [vmem:[#allocation13 + $0x54] sm:$0xf]
    %v1311 = vld [vmem:[#allocation13 + $0x58] sm:$0xf]
    %v1312 = vld [vmem:[#allocation13 + $0x5c] sm:$0xf]
    %v1313 = vld [vmem:[#allocation13 + $0x60] sm:$0xf]
    %v1314 = vld [vmem:[#allocation13 + $0x64] sm:$0xf]
    %v1315 = vld [vmem:[#allocation13 + $0x68] sm:$0xf]
    %v1316 = vld [vmem:[#allocation13 + $0x6c] sm:$0xf]
    %v1317 = vld [vmem:[#allocation13 + $0x70] sm:$0xf]
    %v1318 = vld [vmem:[#allocation13 + $0x74] sm:$0xf]
    %v1319 = vld [vmem:[#allocation13 + $0x78] sm:$0xf]
    %v1320 = vld [vmem:[#allocation13 + $0x7c] sm:$0xf]
    %v1321 = vld [vmem:[#allocation13 + $0x80] sm:$0xf]
    %v1322 = vld [vmem:[#allocation13 + $0x84] sm:$0xf]
    %v1323 = vld [vmem:[#allocation13 + $0x88] sm:$0xf]
    %v1324 = vld [vmem:[#allocation13 + $0x8c] sm:$0xf]
    %v1325 = vld [vmem:[#allocation13 + $0x90] sm:$0xf]
    %v1326 = vld [vmem:[#allocation13 + $0x94] sm:$0xf]
    %v1327 = vld [vmem:[#allocation13 + $0x98] sm:$0xf]
    %v1328 = vld [vmem:[#allocation13 + $0x9c] sm:$0xf]
    %v1329 = vld [vmem:[#allocation13 + $0xa0] sm:$0xf]
    %v1330 = vld [vmem:[#allocation13 + $0xa4] sm:$0xf]
    %v1331 = vld [vmem:[#allocation13 + $0xa8] sm:$0xf]
    %v1332 = vld [vmem:[#allocation13 + $0xac] sm:$0xf]
    %v1333 = vld [vmem:[#allocation13 + $0xb0] sm:$0xf]
    %v1334 = vld [vmem:[#allocation13 + $0xb4] sm:$0xf]
    %v1335 = vld [vmem:[#allocation13 + $0xb8] sm:$0xf]
    %v1336 = vld [vmem:[#allocation13 + $0xbc] sm:$0xf]
    %v1337 = vld [vmem:[#allocation15] sm:$0x1]
    %v1339 = vlaneseq
    %v1340 = vshrl.u32 %v1339, 7
    %v1341 = vsub.s32 0, %v1340
    %v1342 = vrot.slane %v1337, %v1341
    %v1346 = vunpack.c.l.b16 %v1287
    %v1347 = vunpack.c.h.b16 %v1287
    %v1348 = vunpack.c.l.b16 %v1288
    %v1349 = vpack.c.b16 %v1346, %v1346
    %v1350 = vpack.c.b16 %v1347, %v1347
    %v1351 = vpack.c.b16 %v1348, %v1348
    %v1403 = vunpack.c.l.b16 %v1289
    %v1404 = vunpack.c.l.b16 %v1290
    %v1405 = vunpack.c.l.b16 %v1291
    %v1406 = vunpack.c.l.b16 %v1292
    %v1407 = vunpack.c.l.b16 %v1293
    %v1408 = vunpack.c.l.b16 %v1294
    %v1409 = vunpack.c.l.b16 %v1295
    %v1410 = vunpack.c.l.b16 %v1296
    %v1411 = vunpack.c.l.b16 %v1297
    %v1412 = vunpack.c.l.b16 %v1298
    %v1413 = vunpack.c.l.b16 %v1299
    %v1414 = vunpack.c.l.b16 %v1300
    %v1415 = vunpack.c.l.b16 %v1301
    %v1416 = vunpack.c.l.b16 %v1302
    %v1417 = vunpack.c.l.b16 %v1303
    %v1418 = vunpack.c.l.b16 %v1304
    %v1419 = vunpack.c.l.b16 %v1305
    %v1420 = vunpack.c.l.b16 %v1306
    %v1421 = vunpack.c.l.b16 %v1307
    %v1422 = vunpack.c.l.b16 %v1308
    %v1423 = vunpack.c.l.b16 %v1309
    %v1424 = vunpack.c.l.b16 %v1310
    %v1425 = vunpack.c.l.b16 %v1311
    %v1426 = vunpack.c.l.b16 %v1312
    %v1427 = vunpack.c.l.b16 %v1313
    %v1428 = vunpack.c.l.b16 %v1314
    %v1429 = vunpack.c.l.b16 %v1315
    %v1430 = vunpack.c.l.b16 %v1316
    %v1431 = vunpack.c.l.b16 %v1317
    %v1432 = vunpack.c.l.b16 %v1318
    %v1433 = vunpack.c.l.b16 %v1319
    %v1434 = vunpack.c.l.b16 %v1320
    %v1435 = vunpack.c.l.b16 %v1321
    %v1436 = vunpack.c.l.b16 %v1322
    %v1437 = vunpack.c.l.b16 %v1323
    %v1438 = vunpack.c.l.b16 %v1324
    %v1439 = vunpack.c.l.b16 %v1325
    %v1440 = vunpack.c.l.b16 %v1326
    %v1441 = vunpack.c.l.b16 %v1327
    %v1442 = vunpack.c.l.b16 %v1328
    %v1443 = vunpack.c.l.b16 %v1329
    %v1444 = vunpack.c.l.b16 %v1330
    %v1445 = vunpack.c.l.b16 %v1331
    %v1446 = vunpack.c.l.b16 %v1332
    %v1447 = vunpack.c.l.b16 %v1333
    %v1448 = vunpack.c.l.b16 %v1334
    %v1449 = vunpack.c.l.b16 %v1335
    %v1450 = vunpack.c.l.b16 %v1336
    %v1451 = vpack.c.b16 %v1404, %v1403
    %v1452 = vpack.c.b16 %v1406, %v1405
    %v1453 = vpack.c.b16 %v1408, %v1407
    %v1454 = vpack.c.b16 %v1410, %v1409
    %v1455 = vpack.c.b16 %v1412, %v1411
    %v1456 = vpack.c.b16 %v1414, %v1413
    %v1457 = vpack.c.b16 %v1416, %v1415
    %v1458 = vpack.c.b16 %v1418, %v1417
    %v1459 = vpack.c.b16 %v1420, %v1419
    %v1460 = vpack.c.b16 %v1422, %v1421
    %v1461 = vpack.c.b16 %v1424, %v1423
    %v1462 = vpack.c.b16 %v1426, %v1425
    %v1463 = vpack.c.b16 %v1428, %v1427
    %v1464 = vpack.c.b16 %v1430, %v1429
    %v1465 = vpack.c.b16 %v1432, %v1431
    %v1466 = vpack.c.b16 %v1434, %v1433
    %v1467 = vpack.c.b16 %v1436, %v1435
    %v1468 = vpack.c.b16 %v1438, %v1437
    %v1469 = vpack.c.b16 %v1440, %v1439
    %v1470 = vpack.c.b16 %v1442, %v1441
    %v1471 = vpack.c.b16 %v1444, %v1443
    %v1472 = vpack.c.b16 %v1446, %v1445
    %v1473 = vpack.c.b16 %v1448, %v1447
    %v1474 = vpack.c.b16 %v1450, %v1449
    %1499 = vmatprep.subr.bf16.mxu0 0
    %1500 = vmatpush1.bf16.msra.mxu0 %v1451
    %1501 = vmatprep.subr.bf16.mxu0 0
    %1502 = vmatpush1.bf16.msra.mxu0 %v1452
    %1503 = vmatprep.subr.bf16.mxu0 0
    %1504 = vmatpush1.bf16.msra.mxu0 %v1453
    %1505 = vmatprep.subr.bf16.mxu0 0
    %1506 = vmatpush1.bf16.msra.mxu0 %v1454
    %1507 = vmatprep.subr.bf16.mxu0 0
    %1508 = vmatpush1.bf16.msra.mxu0 %v1455
    %1509 = vmatprep.subr.bf16.mxu0 0
    %1510 = vmatpush1.bf16.msra.mxu0 %v1456
    %1511 = vmatprep.subr.bf16.mxu0 0
    %1512 = vmatpush1.bf16.msra.mxu0 %v1457
    %1513 = vmatprep.subr.bf16.mxu0 0
    %1514 = vmatpush1.bf16.msra.mxu0 %v1458
    %1515 = vmatprep.subr.bf16.mxu0 0
    %1516 = vmatpush1.bf16.msra.mxu0 %v1459
    %1517 = vmatprep.subr.bf16.mxu0 0
    %1518 = vmatpush1.bf16.msra.mxu0 %v1460
    %1519 = vmatprep.subr.bf16.mxu0 0
    %1520 = vmatpush1.bf16.msra.mxu0 %v1461
    %1521 = vmatprep.subr.bf16.mxu0 0
    %1522 = vmatpush1.bf16.msra.mxu0 %v1462
    %1523 = vmatprep.subr.bf16.mxu0 0
    %1524 = vmatpush1.bf16.msra.mxu0 %v1463
    %1525 = vmatprep.subr.bf16.mxu0 0
    %1526 = vmatpush1.bf16.msra.mxu0 %v1464
    %1527 = vmatprep.subr.bf16.mxu0 0
    %1528 = vmatpush1.bf16.msra.mxu0 %v1465
    %1529 = vmatprep.subr.bf16.mxu0 0
    %1530 = vmatpush1.bf16.msra.mxu0 %v1466
    %1531 = vmatprep.mubr.bf16.mxu0 %v1350
    %1532 = vmatmul.mubr.bf16.gmra.mrb[0].mxu0 %v1349
    %v1533 = vpop.f32.mrb[0].mxu0
    %v1534 = vadd.f32 %v1342, %v1533
    %v1535 = vpop.f32.mrb[0].mxu0
    %v1536 = vpop.f32.mrb[0].mxu0
    %v1537 = vpop.f32.mrb[0].mxu0
    %1538 = vdwg.mxu0
    %1539 = vmatprep.subr.bf16.mxu0 0
    %1540 = vmatpush1.bf16.msra.mxu0 %v1467
    %1541 = vmatprep.subr.bf16.mxu0 0
    %1542 = vmatpush1.bf16.msra.mxu0 %v1468
    %1543 = vmatprep.subr.bf16.mxu0 0
    %1544 = vmatpush1.bf16.msra.mxu0 %v1469
    %1545 = vmatprep.subr.bf16.mxu0 0
    %1546 = vmatpush1.bf16.msra.mxu0 %v1470
    %1547 = vmatprep.subr.bf16.mxu0 0
    %1548 = vmatpush1.bf16.msra.mxu0 %v1471
    %1549 = vmatprep.subr.bf16.mxu0 0
    %1550 = vmatpush1.bf16.msra.mxu0 %v1472
    %1551 = vmatprep.subr.bf16.mxu0 0
    %1552 = vmatpush1.bf16.msra.mxu0 %v1473
    %1553 = vmatprep.subr.bf16.mxu0 0
    %1554 = vmatpush1.bf16.msra.mxu0 %v1474
    %1555 = vmatprep.subr.bf16.mxu0 0
    %1556 = vmatpush1.bf16.msra.mxu0 0
    %1557 = vmatprep.subr.bf16.mxu0 0
    %1558 = vmatpush1.bf16.msra.mxu0 0
    %1559 = vmatprep.subr.bf16.mxu0 0
    %1560 = vmatpush1.bf16.msra.mxu0 0
    %1561 = vmatprep.subr.bf16.mxu0 0
    %1562 = vmatpush1.bf16.msra.mxu0 0
    %1563 = vmatprep.subr.bf16.mxu0 0
    %1564 = vmatpush1.bf16.msra.mxu0 0
    %1565 = vmatprep.subr.bf16.mxu0 0
    %1566 = vmatpush1.bf16.msra.mxu0 0
    %1567 = vmatprep.subr.bf16.mxu0 0
    %1568 = vmatpush1.bf16.msra.mxu0 0
    %1569 = vmatprep.subr.bf16.mxu0 0
    %1570 = vmatpush1.bf16.msra.mxu0 0
    %1571 = vmatprep.mubr.bf16.mxu0 0
    %1572 = vmatmul.mubr.bf16.gmra.mrb[0].mxu0 %v1351
    %v1573 = vpop.f32.mrb[0].mxu0
    %v1574 = vadd.f32 %v1534, %v1573
    %v1575 = vpop.f32.mrb[0].mxu0
    %v1576 = vpop.f32.mrb[0].mxu0
    %v1577 = vpop.f32.mrb[0].mxu0
    %1578 = vdwg.mxu0
    %v1579 = vtanh.pop %v1574
    %1580 = vst [vmem:[#allocation16] sm:$0xff] %v1579
    // Predicated region
    $region58: #{tpu_custom_call.1} parent=1 // pred_check
      _
    $region59: #{tpu_custom_call.1} parent=1 // pred_check_branch
      %1582 = sbr.rel (0) target = $region61
    $region60: #{tpu_custom_call.1} parent=1 // pred_region
      %s1584 = ssub.s32 128, 128
      %1585 = vsyncadd [#allocation6], %s1584
      %s1587 = sshll.u32 [#allocation16], 4
      %s1588 = int_to_ptr.vmem [resolvable:$true] %s1587
      %1590 = dma.vmem_to_hbm [thread:$0]  %s1588, 128, %s7, [#allocation6]
    $region61: #{tpu_custom_call.1} parent=1 // pred_fallthru
      _
    // Predicated region
    $region62: #{tpu_custom_call.1} parent=1 // pred_check
      _
    $region63: #{tpu_custom_call.1} parent=1 // pred_check_branch
      %1592 = sbr.rel (0) target = $region65
    $region64: #{tpu_custom_call.1} parent=1 // pred_region
      %1593 = dma.done [#allocation6], 128
    $region65: #{tpu_custom_call.1} parent=1 // pred_fallthru
      _
    %1594 = vsyncpa [#allocation5], 1
    %1595 = vsyncpa [#allocation8], 1
    %1596 = vsyncpa [#allocation11], 1
    %1597 = vsyncpa [#allocation14], 1
    %1598 = vsyncpa [#allocation6], 1

</llo_original>
